<compile_context>
chip_gen: v5e
topology: v5e:2x2
jax: 0.10.0
libtpu: 0.0.40
codegen_flags: <defaults>
</compile_context>

<pallas_src>
import functools

import jax
import jax.numpy as jnp
from jax import lax
from jax.experimental import pallas as pl
from jax.experimental.pallas import tpu as pltpu


def _round_up(x, m):
    return (x + m - 1) // m * m


def _super_bert_output_kernel(x_ref, w_ref, b_ref, res_ref, g_ref, beta_ref,
                              o_ref, *, eps):
    # x_ref: (tm, K)   w_ref: (N, K)   b/g/beta: (1, N)   res_ref/o_ref: (tm, N)
    # dense: y = x @ W^T + b  (contract K of both operands -> MXU-native trans_b)
    y = lax.dot_general(
        x_ref[...], w_ref[...],
        dimension_numbers=(((1,), (1,)), ((), ())),
        preferred_element_type=jnp.float32)
    y = y + b_ref[...].astype(jnp.float32)
    # TODO(synk): dropout omitted (eval mode / identity at inference).
    y = y + res_ref[...].astype(jnp.float32)
    # LayerNorm (TF-style: eps inside the sqrt, biased variance) over last dim.
    u = jnp.mean(y, axis=-1, keepdims=True)
    d = y - u
    s = jnp.mean(d * d, axis=-1, keepdims=True)
    y = d * lax.rsqrt(s + eps)                        # rsqrt -> EUP slot
    o_ref[...] = (g_ref[...].astype(jnp.float32) * y
                  + beta_ref[...].astype(jnp.float32)).astype(o_ref.dtype)


def super_bert_output(hidden_states, input_tensor, dense_weight, dense_bias,
                      ln_weight, ln_bias, intermediate_size, sample_embed_dim,
                      *, eps=1e-12, tm=256, vmem_limit_bytes=None):
    """Forward pass of SuperBertOutput with supernet weight sampling.

    hidden_states: [B, S, intermediate_size]
    input_tensor:  [B, S, sample_embed_dim]
    dense_weight:  [super_hidden, super_intermediate]   (PyTorch Linear [out, in])
    """
    # --- supernet sampling (glue, plain JAX slicing) ---
    w = dense_weight[:sample_embed_dim, :intermediate_size]   # (N, K), untransposed
    b = dense_bias[:sample_embed_dim]                         # (N,)
    g = ln_weight[:sample_embed_dim]                          # (N,)
    beta = ln_bias[:sample_embed_dim]                         # (N,)

    B, S, K = hidden_states.shape
    assert K == intermediate_size
    N = sample_embed_dim
    assert input_tensor.shape == (B, S, N)
    M = B * S

    # Row tile: as large as requested for MXU utilization, but clamped for
    # small M; keep a dtype-friendly sublane multiple and pad ragged M.
    sub = 16 if hidden_states.dtype == jnp.bfloat16 else 8
    tm_eff = max(sub, min(tm, _round_up(M, sub)))
    tm_eff = _round_up(tm_eff, sub)
    M_pad = _round_up(M, tm_eff)

    x = hidden_states.reshape(M, K)
    res = input_tensor.reshape(M, N)
    if M_pad != M:
        # Zero rows are benign: LayerNorm of a constant row stays finite and
        # padded rows are sliced off below.
        x = jnp.pad(x, ((0, M_pad - M), (0, 0)))
        res = jnp.pad(res, ((0, M_pad - M), (0, 0)))

    b2 = b.reshape(1, N)
    g2 = g.reshape(1, N)
    beta2 = beta.reshape(1, N)

    if vmem_limit_bytes is None:
        in_bytes = jnp.dtype(hidden_states.dtype).itemsize
        w_bytes = jnp.dtype(w.dtype).itemsize
        est = (2 * tm_eff * K * in_bytes        # x tile (double-buffered)
               + 2 * tm_eff * N * in_bytes      # residual tile
               + 2 * tm_eff * N * in_bytes      # output tile
               + 2 * N * K * w_bytes            # weight (worst case 2 buffers)
               + 8 * N * 4)                     # bias / gamma / beta
        # Headroom, but never above 64 MiB so v7x (64 MiB physical VMEM) is safe.
        vmem_limit_bytes = min(max(2 * est, 32 << 20), 64 << 20)

    kernel = functools.partial(_super_bert_output_kernel, eps=eps)
    grid = (M_pad // tm_eff,)

    def make_call(single_buf):
        def inv_spec(shape):
            # Grid-invariant operands: don't waste VMEM double-buffering them.
            if single_buf:
                return pl.BlockSpec(shape, lambda i: (0, 0),
                                    pipeline_mode=pl.Buffered(buffer_count=1))
            return pl.BlockSpec(shape, lambda i: (0, 0))

        return pl.pallas_call(
            kernel,
            out_shape=jax.ShapeDtypeStruct((M_pad, N), hidden_states.dtype),
            grid_spec=pltpu.PrefetchScalarGridSpec(
                num_scalar_prefetch=0,
                grid=grid,
                in_specs=[
                    pl.BlockSpec((tm_eff, K), lambda i: (i, 0)),   # x tile
                    inv_spec((N, K)),                              # weight (N, K)
                    inv_spec((1, N)),                              # bias
                    pl.BlockSpec((tm_eff, N), lambda i: (i, 0)),   # residual tile
                    inv_spec((1, N)),                              # LN gamma
                    inv_spec((1, N)),                              # LN beta
                ],
                out_specs=pl.BlockSpec((tm_eff, N), lambda i: (i, 0)),
            ),
            compiler_params=pltpu.CompilerParams(
                dimension_semantics=("parallel",),
                vmem_limit_bytes=vmem_limit_bytes),
        )

    args = (x, w, b2, res, g2, beta2)
    try:
        out = make_call(single_buf=True)(*args)
    except Exception:
        # This jax build rejects single-buffered (pl.Buffered(1)) BlockSpecs;
        # fall back to default double buffering (correct, slightly more VMEM).
        out = make_call(single_buf=False)(*args)

    out = out[:M]
    return out.reshape(B, S, N)


def _reference(hidden_states, input_tensor, dense_weight, dense_bias,
               ln_weight, ln_bias, intermediate_size, sample_embed_dim,
               eps=1e-12):
    w = dense_weight[:sample_embed_dim, :intermediate_size]
    b = dense_bias[:sample_embed_dim]
    y = jnp.einsum("bsk,nk->bsn", hidden_states, w,
                   precision=lax.Precision.HIGHEST) + b
    y = y + input_tensor
    u = jnp.mean(y, axis=-1, keepdims=True)
    s = jnp.mean((y - u) ** 2, axis=-1, keepdims=True)
    y = (y - u) / jnp.sqrt(s + eps)
    return ln_weight[:sample_embed_dim] * y + ln_bias[:sample_embed_dim]


if __name__ == "__main__":
    # supernet dims
    super_intermediate = 128
    super_hidden = 64

    key = jax.random.PRNGKey(0)
    k1, k2, k3, k4, k5, k6 = jax.random.split(key, 6)

    # deterministic parameter init (xavier-uniform-like for dense weight)
    limit = (6.0 / (super_intermediate + super_hidden)) ** 0.5
    dense_weight = jax.random.uniform(
        k1, (super_hidden, super_intermediate), jnp.float32, -limit, limit)
    dense_bias = 0.1 * jax.random.normal(k4, (super_hidden,), jnp.float32)
    ln_weight = 1.0 + 0.1 * jax.random.normal(k5, (super_hidden,), jnp.float32)
    ln_bias = 0.1 * jax.random.normal(k6, (super_hidden,), jnp.float32)

    cases = [
        # (B, S, sample_intermediate, sample_embed)
        (2, 8, 64, 32),    # aligned M = 16
        (3, 20, 96, 48),   # ragged M = 60 -> exercises row padding path
    ]
    for idx, (B, S, Ksamp, Nsamp) in enumerate(cases):
        kh = jax.random.fold_in(k2, idx)
        kr = jax.random.fold_in(k3, idx)
        hidden_states = jax.random.normal(kh, (B, S, Ksamp), jnp.float32)
        input_tensor = jax.random.normal(kr, (B, S, Nsamp), jnp.float32)

        out = super_bert_output(hidden_states, input_tensor, dense_weight,
                                dense_bias, ln_weight, ln_bias, Ksamp, Nsamp)
        out = jax.block_until_ready(out)

        ref = _reference(hidden_states, input_tensor, dense_weight, dense_bias,
                         ln_weight, ln_bias, Ksamp, Nsamp)
        assert out.shape == (B, S, Nsamp)
        assert jnp.allclose(out, ref, atol=2e-5, rtol=2e-5), (
            "max abs err =", float(jnp.max(jnp.abs(out - ref))))

    print("KERNEL_OK")
</pallas_src>

<mosaic_0001>
module attributes {stable_mosaic.version = 11 : i64} {
  func.func @_super_bert_output_kernel(%arg0: i32, %arg1: memref<16x64xf32, #tpu.memory_space<vmem>>, %arg2: memref<32x64xf32, #tpu.memory_space<vmem>>, %arg3: memref<1x32xf32, #tpu.memory_space<vmem>>, %arg4: memref<16x32xf32, #tpu.memory_space<vmem>>, %arg5: memref<1x32xf32, #tpu.memory_space<vmem>>, %arg6: memref<1x32xf32, #tpu.memory_space<vmem>>, %arg7: memref<16x32xf32, #tpu.memory_space<vmem>>) attributes {dimension_semantics = [#tpu.dimension_semantics<parallel>], iteration_bounds = array<i64: 1>, scalar_prefetch = 0 : i64, scratch_operands = 0 : i64, tpu.core_type = #tpu.core_type<tc>, window_params = [{transform_indices = @transform_0, window_bounds = array<i64: 16, 64>}, {pipeline_mode = #tpu.pipeline_mode<synchronous>, transform_indices = @transform_1, window_bounds = array<i64: 32, 64>}, {pipeline_mode = #tpu.pipeline_mode<synchronous>, transform_indices = @transform_2, window_bounds = array<i64: 1, 32>}, {transform_indices = @transform_3, window_bounds = array<i64: 16, 32>}, {pipeline_mode = #tpu.pipeline_mode<synchronous>, transform_indices = @transform_4, window_bounds = array<i64: 1, 32>}, {pipeline_mode = #tpu.pipeline_mode<synchronous>, transform_indices = @transform_5, window_bounds = array<i64: 1, 32>}, {transform_indices = @transform_6, window_bounds = array<i64: 16, 32>}]} {
    %c0 = arith.constant 0 : index
    %c0_0 = arith.constant 0 : index
    %0 = vector.load %arg1[%c0, %c0_0] : memref<16x64xf32, #tpu.memory_space<vmem>>, vector<16x64xf32>
    %c0_1 = arith.constant 0 : index
    %c0_2 = arith.constant 0 : index
    %1 = vector.load %arg2[%c0_1, %c0_2] : memref<32x64xf32, #tpu.memory_space<vmem>>, vector<32x64xf32>
    %cst = arith.constant dense<0.000000e+00> : vector<16x32xf32>
    %2 = tpu.matmul %0, %1, %cst {dimension_numbers = #tpu.dot_dimension_numbers<[1], [1], [0], [0], [0, 0, 1, 0], [], []>} : vector<16x64xf32>, vector<32x64xf32>, vector<16x32xf32> -> vector<16x32xf32>
    %c0_3 = arith.constant 0 : index
    %c0_4 = arith.constant 0 : index
    %3 = vector.load %arg3[%c0_3, %c0_4] : memref<1x32xf32, #tpu.memory_space<vmem>>, vector<1x32xf32>
    %4 = vector.broadcast %3 : vector<1x32xf32> to vector<16x32xf32>
    %5 = arith.addf %2, %4 : vector<16x32xf32>
    %c0_5 = arith.constant 0 : index
    %c0_6 = arith.constant 0 : index
    %6 = vector.load %arg4[%c0_5, %c0_6] : memref<16x32xf32, #tpu.memory_space<vmem>>, vector<16x32xf32>
    %7 = arith.addf %5, %6 : vector<16x32xf32>
    %cst_7 = arith.constant dense<0.000000e+00> : vector<16xf32>
    %8 = vector.multi_reduction <add>, %7, %cst_7 [1] : vector<16x32xf32> to vector<16xf32>
    %9 = vector.shape_cast %8 : vector<16xf32> to vector<16x1xf32>
    %cst_8 = arith.constant 3.200000e+01 : f32
    %10 = vector.broadcast %cst_8 : f32 to vector<16x1xf32>
    %11 = arith.divf %9, %10 : vector<16x1xf32>
    %12 = vector.broadcast %11 : vector<16x1xf32> to vector<16x32xf32>
    %13 = arith.subf %7, %12 : vector<16x32xf32>
    %14 = arith.mulf %13, %13 : vector<16x32xf32>
    %cst_9 = arith.constant dense<0.000000e+00> : vector<16xf32>
    %15 = vector.multi_reduction <add>, %14, %cst_9 [1] : vector<16x32xf32> to vector<16xf32>
    %16 = vector.shape_cast %15 : vector<16xf32> to vector<16x1xf32>
    %cst_10 = arith.constant 3.200000e+01 : f32
    %17 = vector.broadcast %cst_10 : f32 to vector<16x1xf32>
    %18 = arith.divf %16, %17 : vector<16x1xf32>
    %cst_11 = arith.constant 9.99999996E-13 : f32
    %19 = vector.broadcast %cst_11 : f32 to vector<16x1xf32>
    %20 = arith.addf %18, %19 : vector<16x1xf32>
    %21 = math.rsqrt %20 : vector<16x1xf32>
    %22 = vector.broadcast %21 : vector<16x1xf32> to vector<16x32xf32>
    %23 = arith.mulf %13, %22 : vector<16x32xf32>
    %c0_12 = arith.constant 0 : index
    %c0_13 = arith.constant 0 : index
    %24 = vector.load %arg5[%c0_12, %c0_13] : memref<1x32xf32, #tpu.memory_space<vmem>>, vector<1x32xf32>
    %25 = vector.broadcast %24 : vector<1x32xf32> to vector<16x32xf32>
    %26 = arith.mulf %25, %23 : vector<16x32xf32>
    %c0_14 = arith.constant 0 : index
    %c0_15 = arith.constant 0 : index
    %27 = vector.load %arg6[%c0_14, %c0_15] : memref<1x32xf32, #tpu.memory_space<vmem>>, vector<1x32xf32>
    %28 = vector.broadcast %27 : vector<1x32xf32> to vector<16x32xf32>
    %29 = arith.addf %26, %28 : vector<16x32xf32>
    %c0_16 = arith.constant 0 : index
    %c0_17 = arith.constant 0 : index
    %30 = vector.load %arg7[%c0_16, %c0_17] : memref<16x32xf32, #tpu.memory_space<vmem>>, vector<16x32xf32>
    tpu.vector_store %arg7[%c0_16, %c0_17], %29 {strides = array<i32>} : memref<16x32xf32, #tpu.memory_space<vmem>>, vector<16x32xf32>,
    return
  }
  func.func @transform_0(%arg0: i32) -> (i32, i32) {
    %c0_i32 = arith.constant 0 : i32
    %c0_i32_0 = arith.constant 0 : i32
    return %arg0, %c0_i32 : i32, i32
  }
  func.func @transform_1(%arg0: i32) -> (i32, i32) {
    %c0_i32 = arith.constant 0 : i32
    %c0_i32_0 = arith.constant 0 : i32
    %c0_i32_1 = arith.constant 0 : i32
    return %c0_i32, %c0_i32_0 : i32, i32
  }
  func.func @transform_2(%arg0: i32) -> (i32, i32) {
    %c0_i32 = arith.constant 0 : i32
    %c0_i32_0 = arith.constant 0 : i32
    %c0_i32_1 = arith.constant 0 : i32
    return %c0_i32, %c0_i32_0 : i32, i32
  }
  func.func @transform_3(%arg0: i32) -> (i32, i32) {
    %c0_i32 = arith.constant 0 : i32
    %c0_i32_0 = arith.constant 0 : i32
    return %arg0, %c0_i32 : i32, i32
  }
  func.func @transform_4(%arg0: i32) -> (i32, i32) {
    %c0_i32 = arith.constant 0 : i32
    %c0_i32_0 = arith.constant 0 : i32
    %c0_i32_1 = arith.constant 0 : i32
    return %c0_i32, %c0_i32_0 : i32, i32
  }
  func.func @transform_5(%arg0: i32) -> (i32, i32) {
    %c0_i32 = arith.constant 0 : i32
    %c0_i32_0 = arith.constant 0 : i32
    %c0_i32_1 = arith.constant 0 : i32
    return %c0_i32, %c0_i32_0 : i32, i32
  }
  func.func @transform_6(%arg0: i32) -> (i32, i32) {
    %c0_i32 = arith.constant 0 : i32
    %c0_i32_0 = arith.constant 0 : i32
    return %arg0, %c0_i32 : i32, i32
  }
}

module attributes {stable_mosaic.version = 11 : i64} {
  func.func @_super_bert_output_kernel(%arg0: i32, %arg1: memref<16x64xf32, #tpu.memory_space<vmem>>, %arg2: memref<32x64xf32, #tpu.memory_space<vmem>>, %arg3: memref<1x32xf32, #tpu.memory_space<vmem>>, %arg4: memref<16x32xf32, #tpu.memory_space<vmem>>, %arg5: memref<1x32xf32, #tpu.memory_space<vmem>>, %arg6: memref<1x32xf32, #tpu.memory_space<vmem>>, %arg7: memref<16x32xf32, #tpu.memory_space<vmem>>) attributes {dimension_semantics = [#tpu.dimension_semantics<parallel>], iteration_bounds = array<i64: 1>, scalar_prefetch = 0 : i64, scratch_operands = 0 : i64, tpu.core_type = #tpu.core_type<tc>, window_params = [{transform_indices = @transform_0, window_bounds = array<i64: 16, 64>}, {pipeline_mode = #tpu.pipeline_mode<synchronous>, transform_indices = @transform_1, window_bounds = array<i64: 32, 64>}, {pipeline_mode = #tpu.pipeline_mode<synchronous>, transform_indices = @transform_2, window_bounds = array<i64: 1, 32>}, {transform_indices = @transform_3, window_bounds = array<i64: 16, 32>}, {pipeline_mode = #tpu.pipeline_mode<synchronous>, transform_indices = @transform_4, window_bounds = array<i64: 1, 32>}, {pipeline_mode = #tpu.pipeline_mode<synchronous>, transform_indices = @transform_5, window_bounds = array<i64: 1, 32>}, {transform_indices = @transform_6, window_bounds = array<i64: 16, 32>}]} {
    %c0 = arith.constant 0 : index
    %c0_0 = arith.constant 0 : index
    %0 = vector.load %arg1[%c0, %c0_0] : memref<16x64xf32, #tpu.memory_space<vmem>>, vector<16x64xf32>
    %c0_1 = arith.constant 0 : index
    %c0_2 = arith.constant 0 : index
    %1 = vector.load %arg2[%c0_1, %c0_2] : memref<32x64xf32, #tpu.memory_space<vmem>>, vector<32x64xf32>
    %cst = arith.constant dense<0.000000e+00> : vector<16x32xf32>
    %2 = tpu.matmul %0, %1, %cst {dimension_numbers = #tpu.dot_dimension_numbers<[1], [1], [0], [0], [0, 0, 1, 0], [], []>} : vector<16x64xf32>, vector<32x64xf32>, vector<16x32xf32> -> vector<16x32xf32>
    %c0_3 = arith.constant 0 : index
    %c0_4 = arith.constant 0 : index
    %3 = vector.load %arg3[%c0_3, %c0_4] : memref<1x32xf32, #tpu.memory_space<vmem>>, vector<1x32xf32>
    %4 = vector.broadcast %3 : vector<1x32xf32> to vector<16x32xf32>
    %5 = arith.addf %2, %4 : vector<16x32xf32>
    %c0_5 = arith.constant 0 : index
    %c0_6 = arith.constant 0 : index
    %6 = vector.load %arg4[%c0_5, %c0_6] : memref<16x32xf32, #tpu.memory_space<vmem>>, vector<16x32xf32>
    %7 = arith.addf %5, %6 : vector<16x32xf32>
    %cst_7 = arith.constant dense<0.000000e+00> : vector<16xf32>
    %8 = vector.multi_reduction <add>, %7, %cst_7 [1] : vector<16x32xf32> to vector<16xf32>
    %9 = vector.shape_cast %8 : vector<16xf32> to vector<16x1xf32>
    %cst_8 = arith.constant 3.200000e+01 : f32
    %10 = vector.broadcast %cst_8 : f32 to vector<16x1xf32>
    %11 = arith.divf %9, %10 : vector<16x1xf32>
    %12 = vector.broadcast %11 : vector<16x1xf32> to vector<16x32xf32>
    %13 = arith.subf %7, %12 : vector<16x32xf32>
    %14 = arith.mulf %13, %13 : vector<16x32xf32>
    %cst_9 = arith.constant dense<0.000000e+00> : vector<16xf32>
    %15 = vector.multi_reduction <add>, %14, %cst_9 [1] : vector<16x32xf32> to vector<16xf32>
    %16 = vector.shape_cast %15 : vector<16xf32> to vector<16x1xf32>
    %cst_10 = arith.constant 3.200000e+01 : f32
    %17 = vector.broadcast %cst_10 : f32 to vector<16x1xf32>
    %18 = arith.divf %16, %17 : vector<16x1xf32>
    %cst_11 = arith.constant 9.99999996E-13 : f32
    %19 = vector.broadcast %cst_11 : f32 to vector<16x1xf32>
    %20 = arith.addf %18, %19 : vector<16x1xf32>
    %21 = math.rsqrt %20 : vector<16x1xf32>
    %22 = vector.broadcast %21 : vector<16x1xf32> to vector<16x32xf32>
    %23 = arith.mulf %13, %22 : vector<16x32xf32>
    %c0_12 = arith.constant 0 : index
    %c0_13 = arith.constant 0 : index
    %24 = vector.load %arg5[%c0_12, %c0_13] : memref<1x32xf32, #tpu.memory_space<vmem>>, vector<1x32xf32>
    %25 = vector.broadcast %24 : vector<1x32xf32> to vector<16x32xf32>
    %26 = arith.mulf %25, %23 : vector<16x32xf32>
    %c0_14 = arith.constant 0 : index
    %c0_15 = arith.constant 0 : index
    %27 = vector.load %arg6[%c0_14, %c0_15] : memref<1x32xf32, #tpu.memory_space<vmem>>, vector<1x32xf32>
    %28 = vector.broadcast %27 : vector<1x32xf32> to vector<16x32xf32>
    %29 = arith.addf %26, %28 : vector<16x32xf32>
    %c0_16 = arith.constant 0 : index
    %c0_17 = arith.constant 0 : index
    %30 = vector.load %arg7[%c0_16, %c0_17] : memref<16x32xf32, #tpu.memory_space<vmem>>, vector<16x32xf32>
    tpu.vector_store %arg7[%c0_16, %c0_17], %29 {strides = array<i32>} : memref<16x32xf32, #tpu.memory_space<vmem>>, vector<16x32xf32>,
    return
  }
  func.func @transform_0(%arg0: i32) -> (i32, i32) {
    %c0_i32 = arith.constant 0 : i32
    %c0_i32_0 = arith.constant 0 : i32
    return %arg0, %c0_i32 : i32, i32
  }
  func.func @transform_1(%arg0: i32) -> (i32, i32) {
    %c0_i32 = arith.constant 0 : i32
    %c0_i32_0 = arith.constant 0 : i32
    %c0_i32_1 = arith.constant 0 : i32
    return %c0_i32, %c0_i32_0 : i32, i32
  }
  func.func @transform_2(%arg0: i32) -> (i32, i32) {
    %c0_i32 = arith.constant 0 : i32
    %c0_i32_0 = arith.constant 0 : i32
    %c0_i32_1 = arith.constant 0 : i32
    return %c0_i32, %c0_i32_0 : i32, i32
  }
  func.func @transform_3(%arg0: i32) -> (i32, i32) {
    %c0_i32 = arith.constant 0 : i32
    %c0_i32_0 = arith.constant 0 : i32
    return %arg0, %c0_i32 : i32, i32
  }
  func.func @transform_4(%arg0: i32) -> (i32, i32) {
    %c0_i32 = arith.constant 0 : i32
    %c0_i32_0 = arith.constant 0 : i32
    %c0_i32_1 = arith.constant 0 : i32
    return %c0_i32, %c0_i32_0 : i32, i32
  }
  func.func @transform_5(%arg0: i32) -> (i32, i32) {
    %c0_i32 = arith.constant 0 : i32
    %c0_i32_0 = arith.constant 0 : i32
    %c0_i32_1 = arith.constant 0 : i32
    return %c0_i32, %c0_i32_0 : i32, i32
  }
  func.func @transform_6(%arg0: i32) -> (i32, i32) {
    %c0_i32 = arith.constant 0 : i32
    %c0_i32_0 = arith.constant 0 : i32
    return %arg0, %c0_i32 : i32, i32
  }
}

</mosaic_0001>

<llo_original>
// kernel: tpu_custom_call.1
$region0: #{tpu_custom_call.1}
  #allocation0 [shape = 'u32[]', space=smem, size = 0x4, offset = 0x4, fixed_abs, tag = 'smem constant byte address 0x4 - core index']
  #allocation1 [shape = 'u32[72,128]{1,0:T(1,128)}', space=vmem, size = 0x9000, scoped, tag = 'internal scratch']
  %s0 = inlined_call_operand.hbm [shape: f32[16,64], index: 0, kind: input, shape index: {}]
  %s1 = inlined_call_operand.hbm [shape: f32[32,64], index: 1, kind: input, shape index: {}]
  %s2 = inlined_call_operand.vmem [shape: f32[1,32], index: 2, kind: input, shape index: {}]
  %s3 = inlined_call_operand.hbm [shape: f32[16,32], index: 3, kind: input, shape index: {}]
  %s4 = inlined_call_operand.vmem [shape: f32[1,32], index: 4, kind: input, shape index: {}]
  %s5 = inlined_call_operand.vmem [shape: f32[1,32], index: 5, kind: input, shape index: {}]
  %s6 = inlined_call_operand.hbm [shape: f32[16,32], index: 6, kind: output, shape index: {}]
  %s7 = sld [smem:[#allocation0]]
  $region46: #{tpu_custom_call.1} parent=0
    _
  %s9 = ssub.s32 1, %s7
  %s10 = scalar_select 0, %s9, %s7
  $region1: #{tpu_custom_call.1} parent=0
    #allocation2 [shape = 'u8[8192]{0}', space=vmem, size = 0x2000, scoped, tag = 'input window, operand 0, single buffered']
    #allocation3 [shape = 's32[1]{0}', space=sflag, size = 0x4, scoped, tag = 'scoped memory for tpu_custom_call.1']
    #allocation4 [shape = 's32[1]{0}', space=sflag, size = 0x4, scoped, tag = 'scoped memory for tpu_custom_call.1']
    #allocation5 [shape = 'u8[16384]{0}', space=vmem, size = 0x4000, scoped, tag = 'input window, operand 1, single buffered']
    #allocation6 [shape = 's32[1]{0}', space=sflag, size = 0x4, scoped, tag = 'scoped memory for tpu_custom_call.1']
    #allocation7 [shape = 'u8[8192]{0}', space=vmem, size = 0x2000, scoped, tag = 'input window, operand 3, single buffered']
    #allocation8 [shape = 'u8[8192]{0}', space=vmem, size = 0x2000, scoped, tag = 'output window, operand 0, single buffered']
    %11 = vsyncpa [#allocation3], 0
    %12 = vsyncpa [#allocation6], 0
    %13 = vsyncpa [#allocation4], 0
    // Predicated region
    $region2: #{tpu_custom_call.1} parent=1 // pred_check
      _
    $region3: #{tpu_custom_call.1} parent=1 // pred_check_branch
      %15 = sbr.rel (0) target = $region5
    $region4: #{tpu_custom_call.1} parent=1 // pred_region
      %17 = vsyncadd [#allocation3], 0
      %s18 = sshll.u32 %s0, 4
      %s19 = int_to_ptr.hbm [resolvable:$true] %s18
      %s20 = sshll.u32 [#allocation2], 4
      %s21 = int_to_ptr.vmem [resolvable:$true] %s20
      %26 = dma.hbm_to_vmem [thread:$0]  %s19, 256, %s21, [#allocation3], 128, 128, 8
    $region5: #{tpu_custom_call.1} parent=1 // pred_fallthru
      _
    // Predicated region
    $region6: #{tpu_custom_call.1} parent=1 // pred_check
      _
    $region7: #{tpu_custom_call.1} parent=1 // pred_check_branch
      %28 = sbr.rel (0) target = $region9
    $region8: #{tpu_custom_call.1} parent=1 // pred_region
      %30 = vsyncadd [#allocation6], 0
      %s31 = sshll.u32 %s1, 4
      %s32 = int_to_ptr.hbm [resolvable:$true] %s31
      %s33 = sshll.u32 [#allocation5], 4
      %s34 = int_to_ptr.vmem [resolvable:$true] %s33
      %39 = dma.hbm_to_vmem [thread:$0]  %s32, 512, %s34, [#allocation6], 128, 128, 8
    $region9: #{tpu_custom_call.1} parent=1 // pred_fallthru
      _
    // Predicated region
    $region10: #{tpu_custom_call.1} parent=1 // pred_check
      _
    $region11: #{tpu_custom_call.1} parent=1 // pred_check_branch
      %41 = sbr.rel (0) target = $region13
    $region12: #{tpu_custom_call.1} parent=1 // pred_region
      _
    $region13: #{tpu_custom_call.1} parent=1 // pred_fallthru
      _
    // Predicated region
    $region14: #{tpu_custom_call.1} parent=1 // pred_check
      _
    $region15: #{tpu_custom_call.1} parent=1 // pred_check_branch
      %43 = sbr.rel (0) target = $region17
    $region16: #{tpu_custom_call.1} parent=1 // pred_region
      %45 = vsyncadd [#allocation6], 0
      %s46 = sshll.u32 %s3, 4
      %s47 = int_to_ptr.hbm [resolvable:$true] %s46
      %s48 = sshll.u32 [#allocation7], 4
      %s49 = int_to_ptr.vmem [resolvable:$true] %s48
      %54 = dma.hbm_to_vmem [thread:$0]  %s47, 256, %s49, [#allocation6], 128, 128, 8
    $region17: #{tpu_custom_call.1} parent=1 // pred_fallthru
      _
    // Predicated region
    $region18: #{tpu_custom_call.1} parent=1 // pred_check
      _
    $region19: #{tpu_custom_call.1} parent=1 // pred_check_branch
      %56 = sbr.rel (0) target = $region21
    $region20: #{tpu_custom_call.1} parent=1 // pred_region
      _
    $region21: #{tpu_custom_call.1} parent=1 // pred_fallthru
      _
    // Predicated region
    $region22: #{tpu_custom_call.1} parent=1 // pred_check
      _
    $region23: #{tpu_custom_call.1} parent=1 // pred_check_branch
      %58 = sbr.rel (0) target = $region25
    $region24: #{tpu_custom_call.1} parent=1 // pred_region
      _
    $region25: #{tpu_custom_call.1} parent=1 // pred_fallthru
      _
    // Predicated region
    $region26: #{tpu_custom_call.1} parent=1 // pred_check
      _
    $region27: #{tpu_custom_call.1} parent=1 // pred_check_branch
      %60 = sbr.rel (0) target = $region29
    $region28: #{tpu_custom_call.1} parent=1 // pred_region
      %62 = dma.done [#allocation3], 256
    $region29: #{tpu_custom_call.1} parent=1 // pred_fallthru
      _
    // Predicated region
    $region30: #{tpu_custom_call.1} parent=1 // pred_check
      _
    $region31: #{tpu_custom_call.1} parent=1 // pred_check_branch
      %64 = sbr.rel (0) target = $region33
    $region32: #{tpu_custom_call.1} parent=1 // pred_region
      %66 = dma.done [#allocation6], 512
    $region33: #{tpu_custom_call.1} parent=1 // pred_fallthru
      _
    // Predicated region
    $region34: #{tpu_custom_call.1} parent=1 // pred_check
      _
    $region35: #{tpu_custom_call.1} parent=1 // pred_check_branch
      %68 = sbr.rel (0) target = $region37
    $region36: #{tpu_custom_call.1} parent=1 // pred_region
      %70 = dma.done [#allocation6], 256
    $region37: #{tpu_custom_call.1} parent=1 // pred_fallthru
      _
    %v71 = vld [vmem:[#allocation2] sm:$0xff]
    %v72 = vld [vmem:[#allocation2 + $0x8] sm:$0xff]
    %v73 = vld [vmem:[#allocation5] sm:$0xff]
    %v74 = vld [vmem:[#allocation5 + $0x8] sm:$0xff]
    %v75 = vld [vmem:[#allocation5 + $0x10] sm:$0xff]
    %v76 = vld [vmem:[#allocation5 + $0x18] sm:$0xff]
    %v77 = vld [vmem:[%s2] sm:$0x1]
    %v79 = vperm.slane %v77, 0
    %vm81 = vcmask 523264
    %v83 = vsel %vm81, %v71, 0
    %v86 = vsel %vm81, %v72, 0
    %v89 = vsel %vm81, %v73, 0
    %v92 = vsel %vm81, %v74, 0
    %v95 = vsel %vm81, %v75, 0
    %v98 = vsel %vm81, %v76, 0
    %100 = vmatpush.xpose.msra.mxu0 0.0
    %101 = vmatpush.xpose.msra.mxu0 0.0
    %102 = vmatpush.xpose.msra.mxu0 0.0
    %103 = vmatpush.xpose.msra.mxu0 0.0
    %104 = vmatpush.xpose.msra.mxu0 0.0
    %105 = vmatpush.xpose.msra.mxu0 0.0
    %106 = vmatpush.xpose.msra.mxu0 0.0
    %107 = vmatpush.xpose.msra.mxu0 0.0
    %108 = vmatpush.xpose.msra.mxu0 0.0
    %109 = vmatpush.xpose.msra.mxu0 0.0
    %110 = vmatpush.xpose.msra.mxu0 0.0
    %111 = vmatpush.xpose.msra.mxu0 0.0
    %112 = vmatpush.xpose.msra.mxu0 %v98
    %113 = vmatpush.xpose.msra.mxu0 %v95
    %114 = vmatpush.xpose.msra.mxu0 %v92
    %115 = vmatpush.xpose.msra.mxu0 %v89
    %116 = vmatmul.f32.gmra.mxu0 %v83
    %v117 = vpop.f32.mrf.mxu0
    %v118 = vadd.f32 %v79, %v117
    %119 = vmatmul.f32.gmra.mxu0 %v86
    %v120 = vpop.f32.mrf.mxu0
    %v121 = vadd.f32 %v79, %v120
    %122 = vdwg.mxu0
    %v123 = vld [vmem:[#allocation7] sm:$0xff]
    %v124 = vld [vmem:[#allocation7 + $0x8] sm:$0xff]
    %v125 = vadd.f32 %v118, %v123
    %v126 = vadd.f32 %v121, %v124
    %vm127 = vcmask 261120
    %v128 = vsel %vm127, %v125, 0.0
    %129 = vadd.xlane.f32.xlu0 %v128
    %v130 = vpop.xlane.xlu0 %129
    %v131 = vsel %vm127, %v126, 0.0
    %132 = vadd.xlane.f32.xlu0 %v131
    %v133 = vpop.xlane.xlu0 %132
    %v134 = vrcp.pop 32.0
    %v135 = vmul.f32 32.0, %v134
    %v136 = vsub.f32 1.0, %v135
    %v137 = vmul.f32 %v134, %v136
    %v138 = vadd.f32 %v134, %v137
    %vm139 = vweird.f32 %v134
    %v140 = vsel %vm139, %v134, %v138
    %v141 = vmul.f32 %v130, %v140
    %v142 = vmul.f32 %v133, %v140
    %v143 = vsub.f32 %v125, %v141
    %v144 = vsub.f32 %v126, %v142
    %v145 = vmul.f32 %v143, %v143
    %v146 = vmul.f32 %v144, %v144
    %v147 = vsel %vm127, %v145, 0.0
    %148 = vadd.xlane.f32.xlu0 %v147
    %v149 = vpop.xlane.xlu0 %148
    %v150 = vsel %vm127, %v146, 0.0
    %151 = vadd.xlane.f32.xlu0 %v150
    %v152 = vpop.xlane.xlu0 %151
    %v153 = vmul.f32 %v149, %v140
    %v154 = vmul.f32 %v152, %v140
    %v155 = vadd.f32 %v153, 1e-12
    %v156 = vadd.f32 %v154, 1e-12
    %v157 = vrsqrt.pop %v155
    %v158 = vmul.f32 %v157, %v155
    %v159 = vmul.f32 %v158, %v157
    %v160 = vmul.f32 0.5, %v159
    %v161 = vsub.f32 1.5, %v160
    %v162 = vmul.f32 %v157, %v161
    %vm163 = vweird.f32 %v155
    %vm164 = vweird.f32 %v157
    %vm165 = vmor %vm163, %vm164
    %v166 = vsel %vm165, %v157, %v162
    %v167 = vrsqrt.pop %v156
    %v168 = vmul.f32 %v167, %v156
    %v169 = vmul.f32 %v168, %v167
    %v170 = vmul.f32 0.5, %v169
    %v171 = vsub.f32 1.5, %v170
    %v172 = vmul.f32 %v167, %v171
    %vm173 = vweird.f32 %v156
    %vm174 = vweird.f32 %v167
    %vm175 = vmor %vm173, %vm174
    %v176 = vsel %vm175, %v167, %v172
    %v177 = vmul.f32 %v143, %v166
    %v178 = vmul.f32 %v144, %v176
    %v179 = vld [vmem:[%s4] sm:$0x1]
    %v181 = vperm.slane %v179, 0
    %v183 = vmul.f32 %v181, %v177
    %v184 = vmul.f32 %v181, %v178
    %v185 = vld [vmem:[%s5] sm:$0x1]
    %v187 = vperm.slane %v185, 0
    %v189 = vadd.f32 %v183, %v187
    %v190 = vadd.f32 %v184, %v187
    %191 = vst.msk [vmem:[#allocation8] sm:$0xff] %vm127, %v189
    %192 = vst.msk [vmem:[#allocation8 + $0x8] sm:$0xff] %vm127, %v190
    // Predicated region
    $region38: #{tpu_custom_call.1} parent=1 // pred_check
      _
    $region39: #{tpu_custom_call.1} parent=1 // pred_check_branch
      %194 = sbr.rel (0) target = $region41
    $region40: #{tpu_custom_call.1} parent=1 // pred_region
      %196 = vsyncadd [#allocation4], 0
      %s197 = sshll.u32 [#allocation8], 4
      %s198 = int_to_ptr.vmem [resolvable:$true] %s197
      %s199 = sshll.u32 %s6, 4
      %s200 = int_to_ptr.hbm [resolvable:$true] %s199
      %205 = dma.vmem_to_hbm [thread:$0]  %s198, 256, %s200, [#allocation4], 128, 128, 8
    $region41: #{tpu_custom_call.1} parent=1 // pred_fallthru
      _
    // Predicated region
    $region42: #{tpu_custom_call.1} parent=1 // pred_check
      _
    $region43: #{tpu_custom_call.1} parent=1 // pred_check_branch
      %207 = sbr.rel (0) target = $region45
    $region44: #{tpu_custom_call.1} parent=1 // pred_region
      %209 = dma.done [#allocation4], 256
    $region45: #{tpu_custom_call.1} parent=1 // pred_fallthru
      _
    %210 = vsyncpa [#allocation3], 1
    %211 = vsyncpa [#allocation6], 1
    %212 = vsyncpa [#allocation4], 1

// kernel: tpu_custom_call.1
$region0: #{tpu_custom_call.1}
  #allocation0 [shape = 'u32[]', space=smem, size = 0x4, offset = 0x4, fixed_abs, tag = 'smem constant byte address 0x4 - core index']
  #allocation1 [shape = 'u32[72,128]{1,0:T(1,128)}', space=vmem, size = 0x9000, scoped, tag = 'internal scratch']
  %s0 = inlined_call_operand.hbm [shape: f32[16,64], index: 0, kind: input, shape index: {}]
  %s1 = inlined_call_operand.hbm [shape: f32[32,64], index: 1, kind: input, shape index: {}]
  %s2 = inlined_call_operand.vmem [shape: f32[1,32], index: 2, kind: input, shape index: {}]
  %s3 = inlined_call_operand.hbm [shape: f32[16,32], index: 3, kind: input, shape index: {}]
  %s4 = inlined_call_operand.vmem [shape: f32[1,32], index: 4, kind: input, shape index: {}]
  %s5 = inlined_call_operand.vmem [shape: f32[1,32], index: 5, kind: input, shape index: {}]
  %s6 = inlined_call_operand.hbm [shape: f32[16,32], index: 6, kind: output, shape index: {}]
  %s7 = sld [smem:[#allocation0]]
  $region46: #{tpu_custom_call.1} parent=0
    _
  %s9 = ssub.s32 1, %s7
  %s10 = scalar_select 0, %s9, %s7
  $region1: #{tpu_custom_call.1} parent=0
    #allocation2 [shape = 'u8[8192]{0}', space=vmem, size = 0x2000, scoped, tag = 'input window, operand 0, single buffered']
    #allocation3 [shape = 's32[1]{0}', space=sflag, size = 0x4, scoped, tag = 'scoped memory for tpu_custom_call.1']
    #allocation4 [shape = 's32[1]{0}', space=sflag, size = 0x4, scoped, tag = 'scoped memory for tpu_custom_call.1']
    #allocation5 [shape = 'u8[16384]{0}', space=vmem, size = 0x4000, scoped, tag = 'input window, operand 1, single buffered']
    #allocation6 [shape = 's32[1]{0}', space=sflag, size = 0x4, scoped, tag = 'scoped memory for tpu_custom_call.1']
    #allocation7 [shape = 'u8[8192]{0}', space=vmem, size = 0x2000, scoped, tag = 'input window, operand 3, single buffered']
    #allocation8 [shape = 'u8[8192]{0}', space=vmem, size = 0x2000, scoped, tag = 'output window, operand 0, single buffered']
    %11 = vsyncpa [#allocation3], 0
    %12 = vsyncpa [#allocation6], 0
    %13 = vsyncpa [#allocation4], 0
    // Predicated region
    $region2: #{tpu_custom_call.1} parent=1 // pred_check
      _
    $region3: #{tpu_custom_call.1} parent=1 // pred_check_branch
      %15 = sbr.rel (0) target = $region5
    $region4: #{tpu_custom_call.1} parent=1 // pred_region
      %17 = vsyncadd [#allocation3], 0
      %s18 = sshll.u32 %s0, 4
      %s19 = int_to_ptr.hbm [resolvable:$true] %s18
      %s20 = sshll.u32 [#allocation2], 4
      %s21 = int_to_ptr.vmem [resolvable:$true] %s20
      %26 = dma.hbm_to_vmem [thread:$0]  %s19, 256, %s21, [#allocation3], 128, 128, 8
    $region5: #{tpu_custom_call.1} parent=1 // pred_fallthru
      _
    // Predicated region
    $region6: #{tpu_custom_call.1} parent=1 // pred_check
      _
    $region7: #{tpu_custom_call.1} parent=1 // pred_check_branch
      %28 = sbr.rel (0) target = $region9
    $region8: #{tpu_custom_call.1} parent=1 // pred_region
      %30 = vsyncadd [#allocation6], 0
      %s31 = sshll.u32 %s1, 4
      %s32 = int_to_ptr.hbm [resolvable:$true] %s31
      %s33 = sshll.u32 [#allocation5], 4
      %s34 = int_to_ptr.vmem [resolvable:$true] %s33
      %39 = dma.hbm_to_vmem [thread:$0]  %s32, 512, %s34, [#allocation6], 128, 128, 8
    $region9: #{tpu_custom_call.1} parent=1 // pred_fallthru
      _
    // Predicated region
    $region10: #{tpu_custom_call.1} parent=1 // pred_check
      _
    $region11: #{tpu_custom_call.1} parent=1 // pred_check_branch
      %41 = sbr.rel (0) target = $region13
    $region12: #{tpu_custom_call.1} parent=1 // pred_region
      _
    $region13: #{tpu_custom_call.1} parent=1 // pred_fallthru
      _
    // Predicated region
    $region14: #{tpu_custom_call.1} parent=1 // pred_check
      _
    $region15: #{tpu_custom_call.1} parent=1 // pred_check_branch
      %43 = sbr.rel (0) target = $region17
    $region16: #{tpu_custom_call.1} parent=1 // pred_region
      %45 = vsyncadd [#allocation6], 0
      %s46 = sshll.u32 %s3, 4
      %s47 = int_to_ptr.hbm [resolvable:$true] %s46
      %s48 = sshll.u32 [#allocation7], 4
      %s49 = int_to_ptr.vmem [resolvable:$true] %s48
      %54 = dma.hbm_to_vmem [thread:$0]  %s47, 256, %s49, [#allocation6], 128, 128, 8
    $region17: #{tpu_custom_call.1} parent=1 // pred_fallthru
      _
    // Predicated region
    $region18: #{tpu_custom_call.1} parent=1 // pred_check
      _
    $region19: #{tpu_custom_call.1} parent=1 // pred_check_branch
      %56 = sbr.rel (0) target = $region21
    $region20: #{tpu_custom_call.1} parent=1 // pred_region
      _
    $region21: #{tpu_custom_call.1} parent=1 // pred_fallthru
      _
    // Predicated region
    $region22: #{tpu_custom_call.1} parent=1 // pred_check
      _
    $region23: #{tpu_custom_call.1} parent=1 // pred_check_branch
      %58 = sbr.rel (0) target = $region25
    $region24: #{tpu_custom_call.1} parent=1 // pred_region
      _
    $region25: #{tpu_custom_call.1} parent=1 // pred_fallthru
      _
    // Predicated region
    $region26: #{tpu_custom_call.1} parent=1 // pred_check
      _
    $region27: #{tpu_custom_call.1} parent=1 // pred_check_branch
      %60 = sbr.rel (0) target = $region29
    $region28: #{tpu_custom_call.1} parent=1 // pred_region
      %62 = dma.done [#allocation3], 256
    $region29: #{tpu_custom_call.1} parent=1 // pred_fallthru
      _
    // Predicated region
    $region30: #{tpu_custom_call.1} parent=1 // pred_check
      _
    $region31: #{tpu_custom_call.1} parent=1 // pred_check_branch
      %64 = sbr.rel (0) target = $region33
    $region32: #{tpu_custom_call.1} parent=1 // pred_region
      %66 = dma.done [#allocation6], 512
    $region33: #{tpu_custom_call.1} parent=1 // pred_fallthru
      _
    // Predicated region
    $region34: #{tpu_custom_call.1} parent=1 // pred_check
      _
    $region35: #{tpu_custom_call.1} parent=1 // pred_check_branch
      %68 = sbr.rel (0) target = $region37
    $region36: #{tpu_custom_call.1} parent=1 // pred_region
      %70 = dma.done [#allocation6], 256
    $region37: #{tpu_custom_call.1} parent=1 // pred_fallthru
      _
    %v71 = vld [vmem:[#allocation2] sm:$0xff]
    %v72 = vld [vmem:[#allocation2 + $0x8] sm:$0xff]
    %v73 = vld [vmem:[#allocation5] sm:$0xff]
    %v74 = vld [vmem:[#allocation5 + $0x8] sm:$0xff]
    %v75 = vld [vmem:[#allocation5 + $0x10] sm:$0xff]
    %v76 = vld [vmem:[#allocation5 + $0x18] sm:$0xff]
    %v77 = vld [vmem:[%s2] sm:$0x1]
    %v79 = vperm.slane %v77, 0
    %vm81 = vcmask 523264
    %v83 = vsel %vm81, %v71, 0
    %v86 = vsel %vm81, %v72, 0
    %v89 = vsel %vm81, %v73, 0
    %v92 = vsel %vm81, %v74, 0
    %v95 = vsel %vm81, %v75, 0
    %v98 = vsel %vm81, %v76, 0
    %100 = vmatpush.xpose.msra.mxu0 0.0
    %101 = vmatpush.xpose.msra.mxu0 0.0
    %102 = vmatpush.xpose.msra.mxu0 0.0
    %103 = vmatpush.xpose.msra.mxu0 0.0
    %104 = vmatpush.xpose.msra.mxu0 0.0
    %105 = vmatpush.xpose.msra.mxu0 0.0
    %106 = vmatpush.xpose.msra.mxu0 0.0
    %107 = vmatpush.xpose.msra.mxu0 0.0
    %108 = vmatpush.xpose.msra.mxu0 0.0
    %109 = vmatpush.xpose.msra.mxu0 0.0
    %110 = vmatpush.xpose.msra.mxu0 0.0
    %111 = vmatpush.xpose.msra.mxu0 0.0
    %112 = vmatpush.xpose.msra.mxu0 %v98
    %113 = vmatpush.xpose.msra.mxu0 %v95
    %114 = vmatpush.xpose.msra.mxu0 %v92
    %115 = vmatpush.xpose.msra.mxu0 %v89
    %116 = vmatmul.f32.gmra.mxu0 %v83
    %v117 = vpop.f32.mrf.mxu0
    %v118 = vadd.f32 %v79, %v117
    %119 = vmatmul.f32.gmra.mxu0 %v86
    %v120 = vpop.f32.mrf.mxu0
    %v121 = vadd.f32 %v79, %v120
    %122 = vdwg.mxu0
    %v123 = vld [vmem:[#allocation7] sm:$0xff]
    %v124 = vld [vmem:[#allocation7 + $0x8] sm:$0xff]
    %v125 = vadd.f32 %v118, %v123
    %v126 = vadd.f32 %v121, %v124
    %vm127 = vcmask 261120
    %v128 = vsel %vm127, %v125, 0.0
    %129 = vadd.xlane.f32.xlu0 %v128
    %v130 = vpop.xlane.xlu0 %129
    %v131 = vsel %vm127, %v126, 0.0
    %132 = vadd.xlane.f32.xlu0 %v131
    %v133 = vpop.xlane.xlu0 %132
    %v134 = vrcp.pop 32.0
    %v135 = vmul.f32 32.0, %v134
    %v136 = vsub.f32 1.0, %v135
    %v137 = vmul.f32 %v134, %v136
    %v138 = vadd.f32 %v134, %v137
    %vm139 = vweird.f32 %v134
    %v140 = vsel %vm139, %v134, %v138
    %v141 = vmul.f32 %v130, %v140
    %v142 = vmul.f32 %v133, %v140
    %v143 = vsub.f32 %v125, %v141
    %v144 = vsub.f32 %v126, %v142
    %v145 = vmul.f32 %v143, %v143
    %v146 = vmul.f32 %v144, %v144
    %v147 = vsel %vm127, %v145, 0.0
    %148 = vadd.xlane.f32.xlu0 %v147
    %v149 = vpop.xlane.xlu0 %148
    %v150 = vsel %vm127, %v146, 0.0
    %151 = vadd.xlane.f32.xlu0 %v150
    %v152 = vpop.xlane.xlu0 %151
    %v153 = vmul.f32 %v149, %v140
    %v154 = vmul.f32 %v152, %v140
    %v155 = vadd.f32 %v153, 1e-12
    %v156 = vadd.f32 %v154, 1e-12
    %v157 = vrsqrt.pop %v155
    %v158 = vmul.f32 %v157, %v155
    %v159 = vmul.f32 %v158, %v157
    %v160 = vmul.f32 0.5, %v159
    %v161 = vsub.f32 1.5, %v160
    %v162 = vmul.f32 %v157, %v161
    %vm163 = vweird.f32 %v155
    %vm164 = vweird.f32 %v157
    %vm165 = vmor %vm163, %vm164
    %v166 = vsel %vm165, %v157, %v162
    %v167 = vrsqrt.pop %v156
    %v168 = vmul.f32 %v167, %v156
    %v169 = vmul.f32 %v168, %v167
    %v170 = vmul.f32 0.5, %v169
    %v171 = vsub.f32 1.5, %v170
    %v172 = vmul.f32 %v167, %v171
    %vm173 = vweird.f32 %v156
    %vm174 = vweird.f32 %v167
    %vm175 = vmor %vm173, %vm174
    %v176 = vsel %vm175, %v167, %v172
    %v177 = vmul.f32 %v143, %v166
    %v178 = vmul.f32 %v144, %v176
    %v179 = vld [vmem:[%s4] sm:$0x1]
    %v181 = vperm.slane %v179, 0
    %v183 = vmul.f32 %v181, %v177
    %v184 = vmul.f32 %v181, %v178
    %v185 = vld [vmem:[%s5] sm:$0x1]
    %v187 = vperm.slane %v185, 0
    %v189 = vadd.f32 %v183, %v187
    %v190 = vadd.f32 %v184, %v187
    %191 = vst.msk [vmem:[#allocation8] sm:$0xff] %vm127, %v189
    %192 = vst.msk [vmem:[#allocation8 + $0x8] sm:$0xff] %vm127, %v190
    // Predicated region
    $region38: #{tpu_custom_call.1} parent=1 // pred_check
      _
    $region39: #{tpu_custom_call.1} parent=1 // pred_check_branch
      %194 = sbr.rel (0) target = $region41
    $region40: #{tpu_custom_call.1} parent=1 // pred_region
      %196 = vsyncadd [#allocation4], 0
      %s197 = sshll.u32 [#allocation8], 4
      %s198 = int_to_ptr.vmem [resolvable:$true] %s197
      %s199 = sshll.u32 %s6, 4
      %s200 = int_to_ptr.hbm [resolvable:$true] %s199
      %205 = dma.vmem_to_hbm [thread:$0]  %s198, 256, %s200, [#allocation4], 128, 128, 8
    $region41: #{tpu_custom_call.1} parent=1 // pred_fallthru
      _
    // Predicated region
    $region42: #{tpu_custom_call.1} parent=1 // pred_check
      _
    $region43: #{tpu_custom_call.1} parent=1 // pred_check_branch
      %207 = sbr.rel (0) target = $region45
    $region44: #{tpu_custom_call.1} parent=1 // pred_region
      %209 = dma.done [#allocation4], 256
    $region45: #{tpu_custom_call.1} parent=1 // pred_fallthru
      _
    %210 = vsyncpa [#allocation3], 1
    %211 = vsyncpa [#allocation6], 1
    %212 = vsyncpa [#allocation4], 1

</llo_original>
